<compile_context>
chip_gen: v7x
topology: tpu7x:2x2x1
jax: 0.10.0
libtpu: 0.0.40
codegen_flags: <defaults>
</compile_context>

<pallas_src>
import functools

import jax
import jax.numpy as jnp
from jax.experimental import pallas as pl
from jax.experimental.pallas import tpu as pltpu

LANE = 128
SUBLANE = 8


def _round_up(n, m):
    return ((n + m - 1) // m) * m


def mlp_kernel(x_ref, w1_ref, b1_ref, w2_ref, o_ref):
    # layer1: [tb, in_pad]bf16 @ [in_pad, h_pad]bf16 -> f32 accumulate
    h = jnp.dot(x_ref[...], w1_ref[...], preferred_element_type=jnp.float32)
    # bias add in f32 (b1 plus the constant-1 bias unit that carries b2)
    h = h + b1_ref[...]
    # dropout (eval mode) -> identity
    # TODO(synk): training-mode dropout would use pltpu.prng_seed + pltpu.stateful_bernoulli.
    h = jnp.maximum(h, 0.0)  # relu; bias unit stays 1.0, padded channels stay 0
    # layer2 (+ folded b2 via the bias-unit row of w2): bf16 operands, f32 acc
    o_ref[...] = jnp.dot(
        h.astype(jnp.bfloat16), w2_ref[...], preferred_element_type=jnp.float32
    ).astype(o_ref.dtype)


def prepare_cartpole_params(w1, b1, w2, b2):
    """One-time (per policy update) parameter fold / pad / cast.

    w1: [num_inputs, hidden]   (transposed vs. torch Linear.weight)
    b1: [hidden]
    w2: [hidden, num_actions]  (transposed vs. torch Linear.weight)
    b2: [num_actions]
    Returns (w1_aug bf16, b1_pad f32, w2_aug bf16, num_actions).
    """
    num_inputs, hidden = w1.shape
    num_actions = w2.shape[1]
    b1 = jnp.reshape(jnp.asarray(b1, jnp.float32), (hidden,))
    b2 = jnp.reshape(jnp.asarray(b2, jnp.float32), (num_actions,))

    in_pad = _round_up(num_inputs, SUBLANE)   # minimal K padding (do NOT go to 128)
    h_pad = _round_up(hidden + 1, LANE)       # +1 constant bias unit carries b2
    a_pad = _round_up(num_actions, LANE)      # lane-dense output slab

    w1_aug = jnp.zeros((in_pad, h_pad), jnp.float32)
    w1_aug = w1_aug.at[:num_inputs, :hidden].set(jnp.asarray(w1, jnp.float32))
    w1_aug = w1_aug.astype(jnp.bfloat16)      # bias-unit column stays 0

    b1_pad = jnp.zeros((1, h_pad), jnp.float32)
    b1_pad = b1_pad.at[0, :hidden].set(b1)
    b1_pad = b1_pad.at[0, hidden].set(1.0)    # bias unit -> ReLU(1.0) == 1.0

    w2_aug = jnp.zeros((h_pad, a_pad), jnp.float32)
    w2_aug = w2_aug.at[:hidden, :num_actions].set(jnp.asarray(w2, jnp.float32))
    w2_aug = w2_aug.at[hidden, :num_actions].set(b2)  # b2 rides the bias unit
    w2_aug = w2_aug.astype(jnp.bfloat16)

    return w1_aug, b1_pad, w2_aug, num_actions


@functools.partial(jax.jit, static_argnames=("num_actions", "batch_tile"))
def cartpole_agent_forward(x, w1_aug, b1_pad, w2_aug, *, num_actions, batch_tile=512):
    """Eval-mode forward of CartPoleAgent on pre-augmented params.

    x: [B, num_inputs] -> returns [B, num_actions] float32 logits.
    """
    B, num_inputs = x.shape
    in_pad, h_pad = w1_aug.shape
    a_pad = w2_aug.shape[1]

    # Batch tiling (tb is forced to a multiple of 8).
    tb = min(_round_up(batch_tile, SUBLANE), _round_up(B, SUBLANE))
    b_pad = _round_up(B, tb)

    # Pad + cast x (fused under jit; no ones-column materialization).
    x = jnp.asarray(x, jnp.float32).astype(jnp.bfloat16)
    if (b_pad - B) or (in_pad - num_inputs):
        x = jnp.pad(x, ((0, b_pad - B), (0, in_pad - num_inputs)))

    # VMEM estimate: double-buffered x/out tiles + resident weights + bias.
    vmem_est = (2 * tb * (in_pad * 2 + a_pad * 4)
                + (in_pad * h_pad + h_pad * a_pad) * 2 + h_pad * 4)
    cp_kwargs = dict(dimension_semantics=("parallel",))
    if vmem_est > 16 * 1024 * 1024:  # v5e default scoped-VMEM limit insurance
        cp_kwargs["vmem_limit_bytes"] = min(2 * vmem_est, 60 * 1024 * 1024)

    grid = (b_pad // tb,)
    out_pad = pl.pallas_call(
        mlp_kernel,
        out_shape=jax.ShapeDtypeStruct((b_pad, a_pad), jnp.float32),
        grid=grid,
        in_specs=[
            pl.BlockSpec((tb, in_pad), lambda i: (i, 0)),
            # Constant block index -> weights/bias DMA'd once, VMEM-resident
            # across every batch tile.
            pl.BlockSpec((in_pad, h_pad), lambda i: (0, 0)),
            pl.BlockSpec((1, h_pad), lambda i: (0, 0)),
            pl.BlockSpec((h_pad, a_pad), lambda i: (0, 0)),
        ],
        out_specs=pl.BlockSpec((tb, a_pad), lambda i: (i, 0)),
        compiler_params=pltpu.CompilerParams(**cp_kwargs),
    )(x, w1_aug, b1_pad, w2_aug)

    return out_pad[:B, :num_actions]


if __name__ == "__main__":
    # 128 stacked CartPole environments in one call; batch_tile=64 -> grid=(2,)
    # so the "parallel" batch axis can shard across both v7x TensorCores.
    batch = 128
    num_inputs = 4
    hidden_dim = 32
    num_actions = 2

    key = jax.random.PRNGKey(0)
    kx, k1, k2, k3, k4 = jax.random.split(key, 5)

    x = jax.random.normal(kx, (batch, num_inputs), dtype=jnp.float32)
    # Weights stored as [in, out] (transposed vs. torch Linear.weight).
    w1 = jax.random.normal(k1, (num_inputs, hidden_dim), dtype=jnp.float32) * 0.1
    b1 = jax.random.normal(k2, (hidden_dim,), dtype=jnp.float32) * 0.1
    w2 = jax.random.normal(k3, (hidden_dim, num_actions), dtype=jnp.float32) * 0.1
    b2 = jax.random.normal(k4, (num_actions,), dtype=jnp.float32) * 0.1

    # One-time parameter fold (hoisted out of the per-step path).
    w1_aug, b1_pad, w2_aug, n_act = prepare_cartpole_params(w1, b1, w2, b2)

    out = cartpole_agent_forward(
        x, w1_aug, b1_pad, w2_aug, num_actions=n_act, batch_tile=64)
    out = jax.block_until_ready(out)

    # Plain-JAX reference with the same bf16 operand rounding / f32 accumulation
    # (eval-mode dropout == identity).
    xb = x.astype(jnp.bfloat16).astype(jnp.float32)
    w1b = w1.astype(jnp.bfloat16).astype(jnp.float32)
    w2b = w2.astype(jnp.bfloat16).astype(jnp.float32)
    b2b = b2.astype(jnp.bfloat16).astype(jnp.float32)
    h_ref = jnp.maximum(xb @ w1b + b1[None, :], 0.0)
    ref = h_ref.astype(jnp.bfloat16).astype(jnp.float32) @ w2b + b2b[None, :]

    assert out.shape == (batch, num_actions)
    assert jnp.allclose(out, ref, atol=2e-3, rtol=2e-3), float(jnp.abs(out - ref).max())

    print("KERNEL_OK")
</pallas_src>

<mosaic_0001>
module attributes {stable_mosaic.version = 11 : i64} {
  func.func @mlp_kernel(%arg0: i32, %arg1: memref<64x8xbf16, #tpu.memory_space<vmem>>, %arg2: memref<8x128xbf16, #tpu.memory_space<vmem>>, %arg3: memref<1x128xf32, #tpu.memory_space<vmem>>, %arg4: memref<128x128xbf16, #tpu.memory_space<vmem>>, %arg5: memref<64x128xf32, #tpu.memory_space<vmem>>) attributes {dimension_semantics = [#tpu.dimension_semantics<parallel>], iteration_bounds = array<i64: 2>, scalar_prefetch = 0 : i64, scratch_operands = 0 : i64, tpu.core_type = #tpu.core_type<tc>, window_params = [{transform_indices = @transform_0, window_bounds = array<i64: 64, 8>}, {pipeline_mode = #tpu.pipeline_mode<synchronous>, transform_indices = @transform_1, window_bounds = array<i64: 8, 128>}, {pipeline_mode = #tpu.pipeline_mode<synchronous>, transform_indices = @transform_2, window_bounds = array<i64: 1, 128>}, {pipeline_mode = #tpu.pipeline_mode<synchronous>, transform_indices = @transform_3, window_bounds = array<i64: 128, 128>}, {transform_indices = @transform_4, window_bounds = array<i64: 64, 128>}]} {
    %c0 = arith.constant 0 : index
    %c0_0 = arith.constant 0 : index
    %0 = vector.load %arg1[%c0, %c0_0] : memref<64x8xbf16, #tpu.memory_space<vmem>>, vector<64x8xbf16>
    %c0_1 = arith.constant 0 : index
    %c0_2 = arith.constant 0 : index
    %1 = vector.load %arg2[%c0_1, %c0_2] : memref<8x128xbf16, #tpu.memory_space<vmem>>, vector<8x128xbf16>
    %cst = arith.constant dense<0.000000e+00> : vector<64x128xf32>
    %2 = tpu.matmul %0, %1, %cst {dimension_numbers = #tpu.dot_dimension_numbers<[1], [0], [0], [1], [0, 0, 1, 1], [], []>} : vector<64x8xbf16>, vector<8x128xbf16>, vector<64x128xf32> -> vector<64x128xf32>
    %c0_3 = arith.constant 0 : index
    %c0_4 = arith.constant 0 : index
    %3 = vector.load %arg3[%c0_3, %c0_4] : memref<1x128xf32, #tpu.memory_space<vmem>>, vector<1x128xf32>
    %4 = vector.broadcast %3 : vector<1x128xf32> to vector<64x128xf32>
    %5 = arith.addf %2, %4 : vector<64x128xf32>
    %cst_5 = arith.constant 0.000000e+00 : f32
    %6 = vector.broadcast %cst_5 : f32 to vector<64x128xf32>
    %7 = arith.maximumf %5, %6 : vector<64x128xf32>
    %8 = arith.truncf %7 : vector<64x128xf32> to vector<64x128xbf16>
    %c0_6 = arith.constant 0 : index
    %c0_7 = arith.constant 0 : index
    %9 = vector.load %arg4[%c0_6, %c0_7] : memref<128x128xbf16, #tpu.memory_space<vmem>>, vector<128x128xbf16>
    %cst_8 = arith.constant dense<0.000000e+00> : vector<64x128xf32>
    %10 = tpu.matmul %8, %9, %cst_8 {dimension_numbers = #tpu.dot_dimension_numbers<[1], [0], [0], [1], [0, 0, 1, 1], [], []>} : vector<64x128xbf16>, vector<128x128xbf16>, vector<64x128xf32> -> vector<64x128xf32>
    %c0_9 = arith.constant 0 : index
    %c0_10 = arith.constant 0 : index
    %11 = vector.load %arg5[%c0_9, %c0_10] : memref<64x128xf32, #tpu.memory_space<vmem>>, vector<64x128xf32>
    tpu.vector_store %arg5[%c0_9, %c0_10], %10 {strides = array<i32>} : memref<64x128xf32, #tpu.memory_space<vmem>>, vector<64x128xf32>,
    return
  }
  func.func @transform_0(%arg0: i32) -> (i32, i32) {
    %c0_i32 = arith.constant 0 : i32
    %c0_i32_0 = arith.constant 0 : i32
    return %arg0, %c0_i32 : i32, i32
  }
  func.func @transform_1(%arg0: i32) -> (i32, i32) {
    %c0_i32 = arith.constant 0 : i32
    %c0_i32_0 = arith.constant 0 : i32
    %c0_i32_1 = arith.constant 0 : i32
    return %c0_i32, %c0_i32_0 : i32, i32
  }
  func.func @transform_2(%arg0: i32) -> (i32, i32) {
    %c0_i32 = arith.constant 0 : i32
    %c0_i32_0 = arith.constant 0 : i32
    %c0_i32_1 = arith.constant 0 : i32
    return %c0_i32, %c0_i32_0 : i32, i32
  }
  func.func @transform_3(%arg0: i32) -> (i32, i32) {
    %c0_i32 = arith.constant 0 : i32
    %c0_i32_0 = arith.constant 0 : i32
    %c0_i32_1 = arith.constant 0 : i32
    return %c0_i32, %c0_i32_0 : i32, i32
  }
  func.func @transform_4(%arg0: i32) -> (i32, i32) {
    %c0_i32 = arith.constant 0 : i32
    %c0_i32_0 = arith.constant 0 : i32
    return %arg0, %c0_i32 : i32, i32
  }
}

</mosaic_0001>

<llo_original>
// kernel: cartpole_agent_forward.1
$region0: #{cartpole_agent_forward.1}
  #allocation0 [shape = 'u32[]', space=smem, size = 0x4, offset = 0x4, fixed_abs, tag = 'smem constant byte address 0x4 - core index']
  #allocation1 [shape = 'u32[144,128]{1,0:T(1,128)}', space=vmem, size = 0x12000, scoped, tag = 'internal scratch']
  %s0 = inlined_call_operand.vmem [shape: bf16[128,8], index: 0, kind: input, shape index: {}]
  %s1 = inlined_call_operand.vmem [shape: bf16[8,128], index: 1, kind: input, shape index: {}]
  %s2 = inlined_call_operand.vmem [shape: f32[1,128], index: 2, kind: input, shape index: {}]
  %s3 = inlined_call_operand.vmem [shape: bf16[128,128], index: 3, kind: input, shape index: {}]
  %s4 = inlined_call_operand.vmem [shape: f32[128,128], index: 4, kind: output, shape index: {}]
  %s5 = sld [smem:[#allocation0]]
  $region49: #{cartpole_agent_forward.1} parent=0
    _
  %s7 = ssub.s32 1, %s5
  %s8 = scalar_select 0, %s7, %s5
  loop: start=0, step=1, limit=4
  $region2: #{cartpole_agent_forward.1} parent=0 // loop_pre_header
    _
  $region3: #{cartpole_agent_forward.1} parent=0 // loop_header
    %s10 = sphi 0, %s14
    %p11 = scmp.ge.s32.totalorder %s10, 4
    %s20 = sphi 0, %s22
    %s23 = sphi 0, %s20
    %s24 = sphi 0, %s23
    %s40 = sphi 0, %s24
    %s44 = sphi 0, %s44
    %s46 = sphi 0, %s44
    %s47 = sphi 0, %s46
    %s61 = sphi 0, %s47
    %s65 = sphi 0, %s65
    %s67 = sphi 0, %s65
    %s68 = sphi 0, %s67
    %s82 = sphi 0, %s68
    %s86 = sphi 0, %s86
    %s88 = sphi 0, %s86
    %s89 = sphi 0, %s88
    %s103 = sphi 0, %s89
    %s109 = sphi 0, %s111
    %s112 = sphi 0, %s109
    %s113 = sphi 0, %s112
    %s129 = sphi 0, %s113
  $region4: #{cartpole_agent_forward.1} parent=0 // loop_header_branch
    %13 = sbr.rel (%p11) target = $region8
  $region5: #{cartpole_agent_forward.1} parent=0 // loop_body
    %s15 = ssub.s32 %s10, 1
    %s16 = ssub.s32 %s10, 2
    %s17 = sadd.s32 %s10, 1
    %s18 = ssub.s32 %s10, %s17
    %p19 = scmp.eq.s32.totalorder %s18, 0
    %s21 = sadd.s32 %s20, 1
    %s22 = scalar_select %p19, %s20, %s21
    %p25 = pneg %p19
    %p26 = scmp.eq.s32.totalorder %s10, 1
    %p27 = por %p25, %p26
    %p28 = scmp.ne.s32.totalorder %s20, %s23
    %p29 = scmp.eq.s32.totalorder %s10, 0
    %p30 = por %p28, %p29
    %p31 = scmp.ne.s32.totalorder %s20, %s23
    %p32 = scmp.eq.s32.totalorder %s15, 1
    %p33 = por %p31, %p32
    %p34 = scmp.ne.s32.totalorder %s23, %s24
    %p35 = scmp.eq.s32.totalorder %s15, 0
    %p36 = por %p34, %p35
    %p37 = scmp.ne.s32.totalorder %s23, %s24
    %p38 = scmp.eq.s32.totalorder %s16, 1
    %p39 = por %p37, %p38
    %p41 = scmp.ne.s32.totalorder %s24, %s40
    %p42 = scmp.eq.s32.totalorder %s16, 0
    %p43 = por %p41, %p42
    %s45 = sadd.s32 %s44, 1
    %p48 = scmp.eq.s32.totalorder %s10, 1
    %p49 = scmp.ne.s32.totalorder %s44, %s46
    %p50 = scmp.eq.s32.totalorder %s10, 0
    %p51 = por %p49, %p50
    %p52 = scmp.ne.s32.totalorder %s44, %s46
    %p53 = scmp.eq.s32.totalorder %s15, 1
    %p54 = por %p52, %p53
    %p55 = scmp.ne.s32.totalorder %s46, %s47
    %p56 = scmp.eq.s32.totalorder %s15, 0
    %p57 = por %p55, %p56
    %p58 = scmp.ne.s32.totalorder %s46, %s47
    %p59 = scmp.eq.s32.totalorder %s16, 1
    %p60 = por %p58, %p59
    %p62 = scmp.ne.s32.totalorder %s47, %s61
    %p63 = scmp.eq.s32.totalorder %s16, 0
    %p64 = por %p62, %p63
    %s66 = sadd.s32 %s65, 1
    %p69 = scmp.eq.s32.totalorder %s10, 1
    %p70 = scmp.ne.s32.totalorder %s65, %s67
    %p71 = scmp.eq.s32.totalorder %s10, 0
    %p72 = por %p70, %p71
    %p73 = scmp.ne.s32.totalorder %s65, %s67
    %p74 = scmp.eq.s32.totalorder %s15, 1
    %p75 = por %p73, %p74
    %p76 = scmp.ne.s32.totalorder %s67, %s68
    %p77 = scmp.eq.s32.totalorder %s15, 0
    %p78 = por %p76, %p77
    %p79 = scmp.ne.s32.totalorder %s67, %s68
    %p80 = scmp.eq.s32.totalorder %s16, 1
    %p81 = por %p79, %p80
    %p83 = scmp.ne.s32.totalorder %s68, %s82
    %p84 = scmp.eq.s32.totalorder %s16, 0
    %p85 = por %p83, %p84
    %s87 = sadd.s32 %s86, 1
    %p90 = scmp.eq.s32.totalorder %s10, 1
    %p91 = scmp.ne.s32.totalorder %s86, %s88
    %p92 = scmp.eq.s32.totalorder %s10, 0
    %p93 = por %p91, %p92
    %p94 = scmp.ne.s32.totalorder %s86, %s88
    %p95 = scmp.eq.s32.totalorder %s15, 1
    %p96 = por %p94, %p95
    %p97 = scmp.ne.s32.totalorder %s88, %s89
    %p98 = scmp.eq.s32.totalorder %s15, 0
    %p99 = por %p97, %p98
    %p100 = scmp.ne.s32.totalorder %s88, %s89
    %p101 = scmp.eq.s32.totalorder %s16, 1
    %p102 = por %p100, %p101
    %p104 = scmp.ne.s32.totalorder %s89, %s103
    %p105 = scmp.eq.s32.totalorder %s16, 0
    %p106 = por %p104, %p105
    %s107 = ssub.s32 %s10, %s17
    %p108 = scmp.eq.s32.totalorder %s107, 0
    %s110 = sadd.s32 %s109, 1
    %s111 = scalar_select %p108, %s109, %s110
    %p114 = pneg %p108
    %p115 = scmp.eq.s32.totalorder %s10, 1
    %p116 = por %p114, %p115
    %p117 = scmp.ne.s32.totalorder %s109, %s112
    %p118 = scmp.eq.s32.totalorder %s10, 0
    %p119 = por %p117, %p118
    %p120 = scmp.ne.s32.totalorder %s109, %s112
    %p121 = scmp.eq.s32.totalorder %s15, 1
    %p122 = por %p120, %p121
    %p123 = scmp.ne.s32.totalorder %s112, %s113
    %p124 = scmp.eq.s32.totalorder %s15, 0
    %p125 = por %p123, %p124
    %p126 = scmp.ne.s32.totalorder %s112, %s113
    %p127 = scmp.eq.s32.totalorder %s16, 1
    %p128 = por %p126, %p127
    %p130 = scmp.ne.s32.totalorder %s113, %s129
    %p131 = scmp.eq.s32.totalorder %s16, 0
    %p132 = por %p130, %p131
    %p133 = scmp.le.s32.totalorder 1, %s10
    %p134 = scmp.lt.s32.totalorder %s10, 3
    %p135 = pnand %p133, %p134
    %p136 = pneg %p135
    // Predicated region
    $region9: #{cartpole_agent_forward.1} parent=5 // pred_check
      _
    $region10: #{cartpole_agent_forward.1} parent=5 // pred_check_branch
      %138 = sbr.rel (%p135) target = $region12
    $region11: #{cartpole_agent_forward.1} parent=5 // pred_region
      %s139 = ssub.s32 %s10, 1
      // Predicated region
      $region13: #{cartpole_agent_forward.1} parent=11 // pred_check
        %p140 = pneg %p57
      $region14: #{cartpole_agent_forward.1} parent=11 // pred_check_branch
        %142 = sbr.rel (%p140) target = $region16
      $region15: #{cartpole_agent_forward.1} parent=11 // pred_region
        _
      $region16: #{cartpole_agent_forward.1} parent=11 // pred_fallthru
        _
      // Predicated region
      $region17: #{cartpole_agent_forward.1} parent=11 // pred_check
        %p143 = pneg %p78
      $region18: #{cartpole_agent_forward.1} parent=11 // pred_check_branch
        %145 = sbr.rel (%p143) target = $region20
      $region19: #{cartpole_agent_forward.1} parent=11 // pred_region
        _
      $region20: #{cartpole_agent_forward.1} parent=11 // pred_fallthru
        _
      // Predicated region
      $region21: #{cartpole_agent_forward.1} parent=11 // pred_check
        %p146 = pneg %p99
      $region22: #{cartpole_agent_forward.1} parent=11 // pred_check_branch
        %148 = sbr.rel (%p146) target = $region24
      $region23: #{cartpole_agent_forward.1} parent=11 // pred_region
        _
      $region24: #{cartpole_agent_forward.1} parent=11 // pred_fallthru
        _
    $region12: #{cartpole_agent_forward.1} parent=5 // pred_fallthru
      _
    %p149 = scmp.lt.s32.totalorder %s10, 2
    // Predicated region
    $region25: #{cartpole_agent_forward.1} parent=5 // pred_check
      %p150 = pneg %p149
    $region26: #{cartpole_agent_forward.1} parent=5 // pred_check_branch
      %152 = sbr.rel (%p150) target = $region28
    $region27: #{cartpole_agent_forward.1} parent=5 // pred_region
      // Predicated region
      $region29: #{cartpole_agent_forward.1} parent=27 // pred_check
        %p153 = pneg %p30
      $region30: #{cartpole_agent_forward.1} parent=27 // pred_check_branch
        %155 = sbr.rel (%p153) target = $region32
      $region31: #{cartpole_agent_forward.1} parent=27 // pred_region
        %s156 = smul.u32 8, %s10
        %p157 = scmp.lt.s32.totalorder %s156, 15
        %s158 = scalar_select %p157, %s156, 15
        %s159 = smul.addr %s158, 4
        %s160 = scalar_lea.vmem %s0, %s159
        %s161 = smul.u32 8, %s10
      $region32: #{cartpole_agent_forward.1} parent=27 // pred_fallthru
        _
    $region28: #{cartpole_agent_forward.1} parent=5 // pred_fallthru
      _
    %p162 = scmp.le.s32.totalorder 1, %s10
    %p163 = scmp.lt.s32.totalorder %s10, 3
    %p164 = pnand %p162, %p163
    %p165 = pneg %p164
    // Predicated region
    $region33: #{cartpole_agent_forward.1} parent=5 // pred_check
      _
    $region34: #{cartpole_agent_forward.1} parent=5 // pred_check_branch
      %167 = sbr.rel (%p164) target = $region36
    $region35: #{cartpole_agent_forward.1} parent=5 // pred_region
      %s168 = ssub.s32 %s10, 1
      %s169 = smul.u32 8, %s15
      %p170 = scmp.lt.s32.totalorder %s169, 15
      %s171 = scalar_select %p170, %s169, 15
      %s172 = smul.addr %s171, 4
      %s173 = scalar_lea.vmem %s0, %s172
      %p174 = pneg %p36
      %p175 = pneg %p33
      %p176 = pneg %p57
      %p177 = pneg %p54
      %p178 = pneg %p78
      %p179 = pneg %p75
      %p180 = pneg %p99
      %p181 = pneg %p96
      %p182 = pneg %p125
      %p183 = pneg %p122
      %s184 = smul.u32 8, %s15
      %p185 = scmp.lt.s32.totalorder %s184, 15
      %s186 = scalar_select %p185, %s184, 15
      %s187 = smul.addr %s186, 8
      %s188 = scalar_lea.vmem %s4, %s187
      %s189 = smul.u32 8, %s15
      %p190 = scmp.lt.s32.totalorder %s189, 15
      %s191 = scalar_select %p190, %s189, 15
      %s192 = smul.addr %s191, 4
      %s193 = scalar_lea.vmem %s0, %s192
      %s194 = smul.u32 8, %s15
      %s195 = smul.u32 8, %s15
      %p196 = scmp.lt.s32.totalorder %s195, 15
      %s197 = scalar_select %p196, %s195, 15
      %s198 = smul.addr %s197, 8
      %s199 = scalar_lea.vmem %s4, %s198
      %s200 = smul.u32 8, %s15
      %v202 = vld [vmem:[%s193] sm:$0xf]
      %v203 = vld [vmem:[%s193 + $0x4] sm:$0xf]
      %v204 = vld [vmem:[%s193 + $0x8] sm:$0xf]
      %v205 = vld [vmem:[%s193 + $0xc] sm:$0xf]
      %v206 = vld [vmem:[%s193 + $0x10] sm:$0xf]
      %v207 = vld [vmem:[%s193 + $0x14] sm:$0xf]
      %v208 = vld [vmem:[%s193 + $0x18] sm:$0xf]
      %v209 = vld [vmem:[%s193 + $0x1c] sm:$0xf]
      %v210 = vld [vmem:[%s1] sm:$0xf]
      %v211 = vld [vmem:[%s2] sm:$0x1]
      %v213 = vlaneseq
      %v214 = vshrl.u32 %v213, 7
      %v215 = vsub.s32 0, %v214
      %v216 = vrot.slane %v211, %v215
      %v226 = vunpack.c.l.b16 %v202
      %v227 = vunpack.c.l.b16 %v203
      %v228 = vunpack.c.l.b16 %v204
      %v229 = vunpack.c.l.b16 %v205
      %v230 = vunpack.c.l.b16 %v206
      %v231 = vunpack.c.l.b16 %v207
      %v232 = vunpack.c.l.b16 %v208
      %v233 = vunpack.c.l.b16 %v209
      %v234 = vpack.c.b16 %v227, %v226
      %v235 = vpack.c.b16 %v229, %v228
      %v236 = vpack.c.b16 %v231, %v230
      %v237 = vpack.c.b16 %v233, %v232
      %vm238 = vcmask 64512
      %v240 = vsel %vm238, %v234, 0
      %v243 = vsel %vm238, %v235, 0
      %v246 = vsel %vm238, %v236, 0
      %v249 = vsel %vm238, %v237, 0
      %vm251 = vcmask 1043456
      %v253 = vsel %vm251, %v210, 0
      %255 = vmatprep.subr.bf16.mxu0 0
      %256 = vmatpush1.bf16.msra.mxu0 %v253
      %257 = vmatprep.subr.bf16.mxu0 0
      %258 = vmatpush1.bf16.msra.mxu0 0
      %259 = vmatprep.subr.bf16.mxu0 0
      %260 = vmatpush1.bf16.msra.mxu0 0
      %261 = vmatprep.subr.bf16.mxu0 0
      %262 = vmatpush1.bf16.msra.mxu0 0
      %263 = vmatprep.subr.bf16.mxu0 0
      %264 = vmatpush1.bf16.msra.mxu0 0
      %265 = vmatprep.subr.bf16.mxu0 0
      %266 = vmatpush1.bf16.msra.mxu0 0
      %267 = vmatprep.subr.bf16.mxu0 0
      %268 = vmatpush1.bf16.msra.mxu0 0
      %269 = vmatprep.subr.bf16.mxu0 0
      %270 = vmatpush1.bf16.msra.mxu0 0
      %271 = vmatprep.subr.bf16.mxu0 0
      %272 = vmatpush1.bf16.msra.mxu0 0
      %273 = vmatprep.subr.bf16.mxu0 0
      %274 = vmatpush1.bf16.msra.mxu0 0
      %275 = vmatprep.subr.bf16.mxu0 0
      %276 = vmatpush1.bf16.msra.mxu0 0
      %277 = vmatprep.subr.bf16.mxu0 0
      %278 = vmatpush1.bf16.msra.mxu0 0
      %279 = vmatprep.subr.bf16.mxu0 0
      %280 = vmatpush1.bf16.msra.mxu0 0
      %281 = vmatprep.subr.bf16.mxu0 0
      %282 = vmatpush1.bf16.msra.mxu0 0
      %283 = vmatprep.subr.bf16.mxu0 0
      %284 = vmatpush1.bf16.msra.mxu0 0
      %285 = vmatprep.subr.bf16.mxu0 0
      %286 = vmatpush1.bf16.msra.mxu0 0
      %287 = vmatprep.mubr.bf16.mxu0 0
      %288 = vmatmul.mubr.bf16.gmra.mrb[0].mxu0 %v240
      %v289 = vpop.f32.mrb[0].mxu0
      %v290 = vadd.f32 %v216, %v289
      %v291 = vpop.f32.mrb[0].mxu0
      %v292 = vpop.f32.mrb[0].mxu0
      %v293 = vadd.f32 %v216, %v292
      %v294 = vpop.f32.mrb[0].mxu0
      %295 = vmatprep.mubr.bf16.mxu0 0
      %296 = vmatmul.mubr.bf16.gmra.mrb[0].mxu0 %v243
      %v297 = vpop.f32.mrb[0].mxu0
      %v298 = vadd.f32 %v216, %v297
      %v299 = vpop.f32.mrb[0].mxu0
      %v300 = vpop.f32.mrb[0].mxu0
      %v301 = vadd.f32 %v216, %v300
      %v302 = vpop.f32.mrb[0].mxu0
      %303 = vmatprep.mubr.bf16.mxu0 0
      %304 = vmatmul.mubr.bf16.gmra.mrb[0].mxu0 %v246
      %v305 = vpop.f32.mrb[0].mxu0
      %v306 = vadd.f32 %v216, %v305
      %v307 = vpop.f32.mrb[0].mxu0
      %v308 = vpop.f32.mrb[0].mxu0
      %v309 = vadd.f32 %v216, %v308
      %v310 = vpop.f32.mrb[0].mxu0
      %311 = vmatprep.mubr.bf16.mxu0 0
      %312 = vmatmul.mubr.bf16.gmra.mrb[0].mxu0 %v249
      %v313 = vpop.f32.mrb[0].mxu0
      %v314 = vadd.f32 %v216, %v313
      %v315 = vpop.f32.mrb[0].mxu0
      %v316 = vpop.f32.mrb[0].mxu0
      %v317 = vadd.f32 %v216, %v316
      %v318 = vpop.f32.mrb[0].mxu0
      %319 = vdwg.mxu0
      %v320 = vmax.f32 %v290, 0.0
      %v321 = vmax.f32 %v293, 0.0
      %v322 = vmax.f32 %v298, 0.0
      %v323 = vmax.f32 %v301, 0.0
      %v324 = vmax.f32 %v306, 0.0
      %v325 = vmax.f32 %v309, 0.0
      %v326 = vmax.f32 %v314, 0.0
      %v327 = vmax.f32 %v317, 0.0
      %v328 = vpack.c.bf16 %v321, %v320
      %v329 = vpack.c.bf16 %v323, %v322
      %v330 = vpack.c.bf16 %v325, %v324
      %v331 = vpack.c.bf16 %v327, %v326
      %v332 = vld [vmem:[%s3] sm:$0xf]
      %v333 = vld [vmem:[%s3 + $0x4] sm:$0xf]
      %v334 = vld [vmem:[%s3 + $0x8] sm:$0xf]
      %v335 = vld [vmem:[%s3 + $0xc] sm:$0xf]
      %v336 = vld [vmem:[%s3 + $0x10] sm:$0xf]
      %v337 = vld [vmem:[%s3 + $0x14] sm:$0xf]
      %v338 = vld [vmem:[%s3 + $0x18] sm:$0xf]
      %v339 = vld [vmem:[%s3 + $0x1c] sm:$0xf]
      %v340 = vld [vmem:[%s3 + $0x20] sm:$0xf]
      %v341 = vld [vmem:[%s3 + $0x24] sm:$0xf]
      %v342 = vld [vmem:[%s3 + $0x28] sm:$0xf]
      %v343 = vld [vmem:[%s3 + $0x2c] sm:$0xf]
      %v344 = vld [vmem:[%s3 + $0x30] sm:$0xf]
      %v345 = vld [vmem:[%s3 + $0x34] sm:$0xf]
      %v346 = vld [vmem:[%s3 + $0x38] sm:$0xf]
      %v347 = vld [vmem:[%s3 + $0x3c] sm:$0xf]
      %v364 = vunpack.c.l.b16 %v332
      %v365 = vunpack.c.l.b16 %v333
      %v366 = vunpack.c.l.b16 %v334
      %v367 = vunpack.c.l.b16 %v335
      %v368 = vunpack.c.l.b16 %v336
      %v369 = vunpack.c.l.b16 %v337
      %v370 = vunpack.c.l.b16 %v338
      %v371 = vunpack.c.l.b16 %v339
      %v372 = vunpack.c.l.b16 %v340
      %v373 = vunpack.c.l.b16 %v341
      %v374 = vunpack.c.l.b16 %v342
      %v375 = vunpack.c.l.b16 %v343
      %v376 = vunpack.c.l.b16 %v344
      %v377 = vunpack.c.l.b16 %v345
      %v378 = vunpack.c.l.b16 %v346
      %v379 = vunpack.c.l.b16 %v347
      %v380 = vpack.c.b16 %v365, %v364
      %v381 = vpack.c.b16 %v367, %v366
      %v382 = vpack.c.b16 %v369, %v368
      %v383 = vpack.c.b16 %v371, %v370
      %v384 = vpack.c.b16 %v373, %v372
      %v385 = vpack.c.b16 %v375, %v374
      %v386 = vpack.c.b16 %v377, %v376
      %v387 = vpack.c.b16 %v379, %v378
      %396 = vmatprep.subr.bf16.mxu0 0
      %397 = vmatpush1.bf16.msra.mxu0 %v380
      %398 = vmatprep.subr.bf16.mxu0 0
      %399 = vmatpush1.bf16.msra.mxu0 %v381
      %400 = vmatprep.subr.bf16.mxu0 0
      %401 = vmatpush1.bf16.msra.mxu0 %v382
      %402 = vmatprep.subr.bf16.mxu0 0
      %403 = vmatpush1.bf16.msra.mxu0 %v383
      %404 = vmatprep.subr.bf16.mxu0 0
      %405 = vmatpush1.bf16.msra.mxu0 %v384
      %406 = vmatprep.subr.bf16.mxu0 0
      %407 = vmatpush1.bf16.msra.mxu0 %v385
      %408 = vmatprep.subr.bf16.mxu0 0
      %409 = vmatpush1.bf16.msra.mxu0 %v386
      %410 = vmatprep.subr.bf16.mxu0 0
      %411 = vmatpush1.bf16.msra.mxu0 %v387
      %412 = vmatprep.subr.bf16.mxu0 0
      %413 = vmatpush1.bf16.msra.mxu0 0
      %414 = vmatprep.subr.bf16.mxu0 0
      %415 = vmatpush1.bf16.msra.mxu0 0
      %416 = vmatprep.subr.bf16.mxu0 0
      %417 = vmatpush1.bf16.msra.mxu0 0
      %418 = vmatprep.subr.bf16.mxu0 0
      %419 = vmatpush1.bf16.msra.mxu0 0
      %420 = vmatprep.subr.bf16.mxu0 0
      %421 = vmatpush1.bf16.msra.mxu0 0
      %422 = vmatprep.subr.bf16.mxu0 0
      %423 = vmatpush1.bf16.msra.mxu0 0
      %424 = vmatprep.subr.bf16.mxu0 0
      %425 = vmatpush1.bf16.msra.mxu0 0
      %426 = vmatprep.subr.bf16.mxu0 0
      %427 = vmatpush1.bf16.msra.mxu0 0
      %428 = vmatprep.mubr.bf16.mxu0 0
      %429 = vmatmul.mubr.bf16.gmra.mrb[0].mxu0 %v328
      %v430 = vpop.f32.mrb[0].mxu0
      %v431 = vadd.f32 0.0, %v430
      %v432 = vpop.f32.mrb[0].mxu0
      %v433 = vpop.f32.mrb[0].mxu0
      %v434 = vadd.f32 0.0, %v433
      %v435 = vpop.f32.mrb[0].mxu0
      %436 = vmatprep.mubr.bf16.mxu0 0
      %437 = vmatmul.mubr.bf16.gmra.mrb[0].mxu0 %v329
      %v438 = vpop.f32.mrb[0].mxu0
      %v439 = vadd.f32 0.0, %v438
      %v440 = vpop.f32.mrb[0].mxu0
      %v441 = vpop.f32.mrb[0].mxu0
      %v442 = vadd.f32 0.0, %v441
      %v443 = vpop.f32.mrb[0].mxu0
      %444 = vmatprep.mubr.bf16.mxu0 0
      %445 = vmatmul.mubr.bf16.gmra.mrb[0].mxu0 %v330
      %v446 = vpop.f32.mrb[0].mxu0
      %v447 = vadd.f32 0.0, %v446
      %v448 = vpop.f32.mrb[0].mxu0
      %v449 = vpop.f32.mrb[0].mxu0
      %v450 = vadd.f32 0.0, %v449
      %v451 = vpop.f32.mrb[0].mxu0
      %452 = vmatprep.mubr.bf16.mxu0 0
      %453 = vmatmul.mubr.bf16.gmra.mrb[0].mxu0 %v331
      %v454 = vpop.f32.mrb[0].mxu0
      %v455 = vadd.f32 0.0, %v454
      %v456 = vpop.f32.mrb[0].mxu0
      %v457 = vpop.f32.mrb[0].mxu0
      %v458 = vadd.f32 0.0, %v457
      %v459 = vpop.f32.mrb[0].mxu0
      %460 = vdwg.mxu0
      %461 = vst [vmem:[%s199] sm:$0xff] %v431
      %462 = vst [vmem:[%s199 + $0x8] sm:$0xff] %v434
      %463 = vst [vmem:[%s199 + $0x10] sm:$0xff] %v439
      %464 = vst [vmem:[%s199 + $0x18] sm:$0xff] %v442
      %465 = vst [vmem:[%s199 + $0x20] sm:$0xff] %v447
      %466 = vst [vmem:[%s199 + $0x28] sm:$0xff] %v450
      %467 = vst [vmem:[%s199 + $0x30] sm:$0xff] %v455
      %468 = vst [vmem:[%s199 + $0x38] sm:$0xff] %v458
      %s469 = smul.u32 8, %s15
      %p470 = scmp.lt.s32.totalorder %s469, 15
      %s471 = scalar_select %p470, %s469, 15
      %s472 = smul.addr %s471, 8
      %s473 = scalar_lea.vmem %s4, %s472
      // Predicated region
      $region37: #{cartpole_agent_forward.1} parent=35 // pred_check
        %p474 = pneg %p122
      $region38: #{cartpole_agent_forward.1} parent=35 // pred_check_branch
        %476 = sbr.rel (%p474) target = $region40
      $region39: #{cartpole_agent_forward.1} parent=35 // pred_region
        %s477 = smul.u32 8, %s15
      $region40: #{cartpole_agent_forward.1} parent=35 // pred_fallthru
        _
    $region36: #{cartpole_agent_forward.1} parent=5 // pred_fallthru
      _
    %p478 = scmp.le.s32.totalorder 2, %s10
    // Predicated region
    $region41: #{cartpole_agent_forward.1} parent=5 // pred_check
      %p479 = pneg %p478
    $region42: #{cartpole_agent_forward.1} parent=5 // pred_check_branch
      %481 = sbr.rel (%p479) target = $region44
    $region43: #{cartpole_agent_forward.1} parent=5 // pred_region
      %s482 = ssub.s32 %s10, 2
      // Predicated region
      $region45: #{cartpole_agent_forward.1} parent=43 // pred_check
        %p483 = pneg %p128
      $region46: #{cartpole_agent_forward.1} parent=43 // pred_check_branch
        %485 = sbr.rel (%p483) target = $region48
      $region47: #{cartpole_agent_forward.1} parent=43 // pred_region
        %s486 = smul.u32 8, %s16
        %p487 = scmp.lt.s32.totalorder %s486, 15
        %s488 = scalar_select %p487, %s486, 15
        %s489 = smul.addr %s488, 8
        %s490 = scalar_lea.vmem %s4, %s489
      $region48: #{cartpole_agent_forward.1} parent=43 // pred_fallthru
        _
    $region44: #{cartpole_agent_forward.1} parent=5 // pred_fallthru
      _
  $region6: #{cartpole_agent_forward.1} parent=0 // loop_footer
    %s14 = sadd.s32 1, %s10
  $region7: #{cartpole_agent_forward.1} parent=0 // loop_footer_branch
    %9 = sbr.rel target = $region3
  $region8: #{cartpole_agent_forward.1} parent=0 // loop_exit
    _

</llo_original>
